<compile_context>
chip_gen: v6e
topology: v6e:2x2x1
jax: 0.10.0
libtpu: 0.0.40
codegen_flags: <defaults>
</compile_context>

<pallas_src>
import functools

import jax
import jax.numpy as jnp
from jax.experimental import pallas as pl
from jax.experimental.pallas import tpu as pltpu

_VMEM_LIMIT_BYTES = 48 * 1024 * 1024  # safe ceiling on v7x (64 MiB physical), raises v5e/v6e default


# ----------------------------------------------------------------------------- kernels
def _single_pass_kernel(x_ref, w1t_ref, b1_ref, w2_ref, b2_ref, o_ref):
    """One batch per grid step.  x_ref block: (1, C, HW), NCHW-native layout."""
    x = x_ref[0]                                                   # (C, HW)
    xf = x.astype(jnp.float32)                                     # f32 accumulation for pooling
    inv_hw = 1.0 / x.shape[1]

    avg = jnp.sum(xf, axis=1, keepdims=True) * inv_hw              # (C, 1)  lane reduce
    mx = jnp.max(xf, axis=1, keepdims=True)                        # (C, 1)  lane reduce

    def mlp(v):                                                    # v: (C, 1)
        # hidden_j = relu(sum_c W1[j, c] * v[c] + b1[j])           -> (1, Cr)   (VPU mul + sublane reduce)
        h = jnp.sum(w1t_ref[...] * v, axis=0, keepdims=True) + b1_ref[...]
        h = jnp.maximum(h, 0.0)
        # att_c = sum_j W2[c, j] * hidden_j + b2[c]                -> (C, 1)    (VPU mul + lane reduce)
        return jnp.sum(w2_ref[...] * h, axis=1, keepdims=True) + b2_ref[...]

    scale = jax.nn.sigmoid(mlp(avg) + mlp(mx))                     # (C, 1) f32
    o_ref[0] = (x * scale).astype(o_ref.dtype)                     # broadcast over HW lanes


def _pool_scale_kernel(hw_total, x_ref, w1t_ref, b1_ref, w2_ref, b2_ref,
                       scale_ref, sum_acc, max_acc):
    """Two-pass path, pass 1: accumulate sum/max over HW tiles, emit sigmoid(mlp+mlp)."""
    t = pl.program_id(1)

    @pl.when(t == 0)
    def _():
        sum_acc[...] = jnp.zeros_like(sum_acc)
        max_acc[...] = jnp.full_like(max_acc, -jnp.inf)

    xf = x_ref[0].astype(jnp.float32)                              # (C, hw_t)
    sum_acc[...] += jnp.sum(xf, axis=1, keepdims=True)
    max_acc[...] = jnp.maximum(max_acc[...], jnp.max(xf, axis=1, keepdims=True))

    @pl.when(t == pl.num_programs(1) - 1)
    def _():
        avg = sum_acc[...] * (1.0 / hw_total)

        def mlp(v):
            h = jnp.sum(w1t_ref[...] * v, axis=0, keepdims=True) + b1_ref[...]
            h = jnp.maximum(h, 0.0)
            return jnp.sum(w2_ref[...] * h, axis=1, keepdims=True) + b2_ref[...]

        scale_ref[0] = jax.nn.sigmoid(mlp(avg) + mlp(max_acc[...]))


def _apply_scale_kernel(x_ref, scale_ref, o_ref):
    """Two-pass path, pass 2: out = x * scale (per-channel broadcast over HW lanes)."""
    o_ref[0] = (x_ref[0] * scale_ref[0]).astype(o_ref.dtype)


# ----------------------------------------------------------------------------- wrapper
def _pick_hw_tile(hw, c, itemsize, target_bytes):
    """Largest divisor of hw whose (C, tile) slab fits target_bytes; prefer lane-dense (mult of 128)."""
    best, best_dense = 1, None
    for t in range(1, hw + 1):
        if hw % t == 0 and c * t * itemsize <= target_bytes:
            best = t
            if t % 128 == 0:
                best_dense = t
    return best_dense if best_dense is not None else best


def channel_gate(x_nchw, w1, b1, w2, b2, *,
                 max_single_pass_bytes=8 << 20,
                 hw_tile_target_bytes=2 << 20):
    """ChannelGate forward.

    x_nchw: (B, C, H, W); w1: (C//r, C); b1: (C//r,); w2: (C, C//r); b2: (C,)
    (PyTorch 1x1-conv weights with the trailing 1x1 dims squeezed).
    """
    B, C, H, W = x_nchw.shape
    HW = H * W
    Cr = w1.shape[0]

    # NCHW-native: collapsing H,W -> HW is a free reshape (no transpose, no extra HBM pass).
    x = x_nchw.reshape(B, C, HW)
    itemsize = x.dtype.itemsize

    # Tiny parameter reshapes (weights only; negligible traffic).
    w1t = jnp.transpose(w1)          # (C, Cr):  w1t[c, j] = W1[j, c]
    b1r = b1.reshape(1, Cr)
    w2m = w2.reshape(C, Cr)
    b2c = b2.reshape(C, 1)

    slab_bytes = C * HW * itemsize
    if slab_bytes <= max_single_pass_bytes:
        # Single pass: one (C, HW) slab per batch, read once / write once.
        out = pl.pallas_call(
            _single_pass_kernel,
            out_shape=jax.ShapeDtypeStruct((B, C, HW), x.dtype),
            grid_spec=pltpu.PrefetchScalarGridSpec(
                num_scalar_prefetch=0,
                grid=(B,),
                in_specs=[
                    pl.BlockSpec((1, C, HW), lambda b: (b, 0, 0)),
                    pl.BlockSpec((C, Cr), lambda b: (0, 0)),
                    pl.BlockSpec((1, Cr), lambda b: (0, 0)),
                    pl.BlockSpec((C, Cr), lambda b: (0, 0)),
                    pl.BlockSpec((C, 1), lambda b: (0, 0)),
                ],
                out_specs=pl.BlockSpec((1, C, HW), lambda b: (b, 0, 0)),
            ),
            compiler_params=pltpu.CompilerParams(
                dimension_semantics=("parallel",),
                vmem_limit_bytes=_VMEM_LIMIT_BYTES),
        )(x, w1t, b1r, w2m, b2c)
        return out.reshape(B, C, H, W)

    # Two-pass HW-tiled path for large feature maps (bounded VMEM, keeps the DMA
    # pipeline double-buffered, and exposes an HW grid axis for the second v7x core).
    hw_t = _pick_hw_tile(HW, C, itemsize, hw_tile_target_bytes)
    n_t = HW // hw_t

    # Pass 1: stream x once, accumulate per-channel sum/max, compute the sigmoid gate.
    scale = pl.pallas_call(
        functools.partial(_pool_scale_kernel, HW),
        out_shape=jax.ShapeDtypeStruct((B, C, 1), jnp.float32),
        grid_spec=pltpu.PrefetchScalarGridSpec(
            num_scalar_prefetch=0,
            grid=(B, n_t),
            in_specs=[
                pl.BlockSpec((1, C, hw_t), lambda b, t: (b, 0, t)),
                pl.BlockSpec((C, Cr), lambda b, t: (0, 0)),
                pl.BlockSpec((1, Cr), lambda b, t: (0, 0)),
                pl.BlockSpec((C, Cr), lambda b, t: (0, 0)),
                pl.BlockSpec((C, 1), lambda b, t: (0, 0)),
            ],
            out_specs=pl.BlockSpec((1, C, 1), lambda b, t: (b, 0, 0)),
            scratch_shapes=[pltpu.VMEM((C, 1), jnp.float32),
                            pltpu.VMEM((C, 1), jnp.float32)],
        ),
        compiler_params=pltpu.CompilerParams(
            dimension_semantics=("parallel", "arbitrary"),
            vmem_limit_bytes=_VMEM_LIMIT_BYTES),
    )(x, w1t, b1r, w2m, b2c)

    # Pass 2: stream x again and apply the per-channel scale (fully parallel grid).
    out = pl.pallas_call(
        _apply_scale_kernel,
        out_shape=jax.ShapeDtypeStruct((B, C, HW), x.dtype),
        grid_spec=pltpu.PrefetchScalarGridSpec(
            num_scalar_prefetch=0,
            grid=(B, n_t),
            in_specs=[
                pl.BlockSpec((1, C, hw_t), lambda b, t: (b, 0, t)),
                pl.BlockSpec((1, C, 1), lambda b, t: (b, 0, 0)),
            ],
            out_specs=pl.BlockSpec((1, C, hw_t), lambda b, t: (b, 0, t)),
        ),
        compiler_params=pltpu.CompilerParams(
            dimension_semantics=("parallel", "parallel"),
            vmem_limit_bytes=_VMEM_LIMIT_BYTES),
    )(x, scale)
    return out.reshape(B, C, H, W)


# ----------------------------------------------------------------------------- reference
def channel_gate_reference(x, w1, b1, w2, b2):
    """Pure-JAX reference mirroring the PyTorch forward (use_rep=False, avg+max pools)."""
    B, C, H, W = x.shape
    xf = x.reshape(B, C, H * W).astype(jnp.float32)
    avg = jnp.mean(xf, axis=2)   # (B, C)
    mx = jnp.max(xf, axis=2)     # (B, C)

    def mlp(v):
        h = jnp.maximum(v @ w1.T + b1, 0.0)
        return h @ w2.T + b2

    scale = jax.nn.sigmoid(mlp(avg) + mlp(mx))[:, :, None, None]
    return (x * scale).astype(x.dtype)


# ----------------------------------------------------------------------------- demo
if __name__ == "__main__":
    key = jax.random.PRNGKey(0)

    def make_case(k, B, C, H, W, r):
        Cr = max(C // r, 1)
        kx, kw1, kb1, kw2, kb2 = jax.random.split(k, 5)
        x = jax.random.normal(kx, (B, C, H, W), dtype=jnp.float32)
        w1 = jax.random.normal(kw1, (Cr, C), dtype=jnp.float32) * 0.1
        b1 = jax.random.normal(kb1, (Cr,), dtype=jnp.float32) * 0.1
        w2 = jax.random.normal(kw2, (C, Cr), dtype=jnp.float32) * 0.1
        b2 = jax.random.normal(kb2, (C,), dtype=jnp.float32) * 0.1
        return x, w1, b1, w2, b2

    k1, k2 = jax.random.split(key)

    # Case 1: small feature map -> single-pass per-batch kernel (HW = 256, lane-dense).
    x, w1, b1, w2, b2 = make_case(k1, B=2, C=32, H=16, W=16, r=16)
    out = jax.block_until_ready(channel_gate(x, w1, b1, w2, b2))
    ref = jax.block_until_ready(channel_gate_reference(x, w1, b1, w2, b2))
    assert out.shape == x.shape and out.dtype == x.dtype
    assert jnp.max(jnp.abs(out - ref)) < 1e-4, "single-pass mismatch vs reference"

    # Case 2: force the HW-tiled two-pass path (exercises sum/max accumulation across tiles).
    x, w1, b1, w2, b2 = make_case(k2, B=1, C=64, H=32, W=32, r=16)
    out = jax.block_until_ready(
        channel_gate(x, w1, b1, w2, b2,
                     max_single_pass_bytes=0, hw_tile_target_bytes=96 * 1024))
    ref = jax.block_until_ready(channel_gate_reference(x, w1, b1, w2, b2))
    assert out.shape == x.shape and out.dtype == x.dtype
    assert jnp.max(jnp.abs(out - ref)) < 1e-4, "two-pass mismatch vs reference"

    print("KERNEL_OK")
</pallas_src>

<mosaic_0001>
module attributes {stable_mosaic.version = 11 : i64} {
  func.func @_single_pass_kernel(%arg0: i32, %arg1: memref<1x32x256xf32, #tpu.memory_space<vmem>>, %arg2: memref<32x2xf32, #tpu.memory_space<vmem>>, %arg3: memref<1x2xf32, #tpu.memory_space<vmem>>, %arg4: memref<32x2xf32, #tpu.memory_space<vmem>>, %arg5: memref<32x1xf32, #tpu.memory_space<vmem>>, %arg6: memref<1x32x256xf32, #tpu.memory_space<vmem>>) attributes {dimension_semantics = [#tpu.dimension_semantics<parallel>], iteration_bounds = array<i64: 2>, scalar_prefetch = 0 : i64, scratch_operands = 0 : i64, tpu.core_type = #tpu.core_type<tc>, window_params = [{transform_indices = @transform_0, window_bounds = array<i64: 1, 32, 256>}, {pipeline_mode = #tpu.pipeline_mode<synchronous>, transform_indices = @transform_1, window_bounds = array<i64: 32, 2>}, {pipeline_mode = #tpu.pipeline_mode<synchronous>, transform_indices = @transform_2, window_bounds = array<i64: 1, 2>}, {pipeline_mode = #tpu.pipeline_mode<synchronous>, transform_indices = @transform_3, window_bounds = array<i64: 32, 2>}, {pipeline_mode = #tpu.pipeline_mode<synchronous>, transform_indices = @transform_4, window_bounds = array<i64: 32, 1>}, {transform_indices = @transform_5, window_bounds = array<i64: 1, 32, 256>}]} {
    %c0 = arith.constant 0 : index
    %c0_0 = arith.constant 0 : index
    %c0_1 = arith.constant 0 : index
    %0 = vector.load %arg1[%c0, %c0_0, %c0_1] : memref<1x32x256xf32, #tpu.memory_space<vmem>>, vector<1x32x256xf32>
    %1 = vector.shape_cast %0 : vector<1x32x256xf32> to vector<32x256xf32>
    %cst = arith.constant dense<0.000000e+00> : vector<32xf32>
    %2 = vector.multi_reduction <add>, %1, %cst [1] : vector<32x256xf32> to vector<32xf32>
    %3 = vector.shape_cast %2 : vector<32xf32> to vector<32x1xf32>
    %cst_2 = arith.constant 3.906250e-03 : f32
    %4 = vector.broadcast %cst_2 : f32 to vector<32x1xf32>
    %5 = arith.mulf %3, %4 : vector<32x1xf32>
    %cst_3 = arith.constant dense<0xFF800000> : vector<32xf32>
    %6 = vector.multi_reduction <maximumf>, %1, %cst_3 [1] : vector<32x256xf32> to vector<32xf32>
    %7 = vector.shape_cast %6 : vector<32xf32> to vector<32x1xf32>
    %c0_4 = arith.constant 0 : index
    %c0_5 = arith.constant 0 : index
    %8 = vector.load %arg2[%c0_4, %c0_5] : memref<32x2xf32, #tpu.memory_space<vmem>>, vector<32x2xf32>
    %9 = vector.broadcast %5 : vector<32x1xf32> to vector<32x2xf32>
    %10 = arith.mulf %8, %9 : vector<32x2xf32>
    %cst_6 = arith.constant dense<0.000000e+00> : vector<2xf32>
    %11 = vector.multi_reduction <add>, %10, %cst_6 [0] : vector<32x2xf32> to vector<2xf32>
    %12 = vector.shape_cast %11 : vector<2xf32> to vector<1x2xf32>
    %c0_7 = arith.constant 0 : index
    %c0_8 = arith.constant 0 : index
    %13 = vector.load %arg3[%c0_7, %c0_8] : memref<1x2xf32, #tpu.memory_space<vmem>>, vector<1x2xf32>
    %14 = arith.addf %12, %13 : vector<1x2xf32>
    %cst_9 = arith.constant 0.000000e+00 : f32
    %15 = vector.broadcast %cst_9 : f32 to vector<1x2xf32>
    %16 = arith.maximumf %14, %15 : vector<1x2xf32>
    %c0_10 = arith.constant 0 : index
    %c0_11 = arith.constant 0 : index
    %17 = vector.load %arg4[%c0_10, %c0_11] : memref<32x2xf32, #tpu.memory_space<vmem>>, vector<32x2xf32>
    %18 = vector.broadcast %16 : vector<1x2xf32> to vector<32x2xf32>
    %19 = arith.mulf %17, %18 : vector<32x2xf32>
    %cst_12 = arith.constant dense<0.000000e+00> : vector<32xf32>
    %20 = vector.multi_reduction <add>, %19, %cst_12 [1] : vector<32x2xf32> to vector<32xf32>
    %21 = vector.shape_cast %20 : vector<32xf32> to vector<32x1xf32>
    %c0_13 = arith.constant 0 : index
    %c0_14 = arith.constant 0 : index
    %22 = vector.load %arg5[%c0_13, %c0_14] : memref<32x1xf32, #tpu.memory_space<vmem>>, vector<32x1xf32>
    %23 = arith.addf %21, %22 : vector<32x1xf32>
    %c0_15 = arith.constant 0 : index
    %c0_16 = arith.constant 0 : index
    %24 = vector.load %arg2[%c0_15, %c0_16] : memref<32x2xf32, #tpu.memory_space<vmem>>, vector<32x2xf32>
    %25 = vector.broadcast %7 : vector<32x1xf32> to vector<32x2xf32>
    %26 = arith.mulf %24, %25 : vector<32x2xf32>
    %cst_17 = arith.constant dense<0.000000e+00> : vector<2xf32>
    %27 = vector.multi_reduction <add>, %26, %cst_17 [0] : vector<32x2xf32> to vector<2xf32>
    %28 = vector.shape_cast %27 : vector<2xf32> to vector<1x2xf32>
    %c0_18 = arith.constant 0 : index
    %c0_19 = arith.constant 0 : index
    %29 = vector.load %arg3[%c0_18, %c0_19] : memref<1x2xf32, #tpu.memory_space<vmem>>, vector<1x2xf32>
    %30 = arith.addf %28, %29 : vector<1x2xf32>
    %cst_20 = arith.constant 0.000000e+00 : f32
    %31 = vector.broadcast %cst_20 : f32 to vector<1x2xf32>
    %32 = arith.maximumf %30, %31 : vector<1x2xf32>
    %c0_21 = arith.constant 0 : index
    %c0_22 = arith.constant 0 : index
    %33 = vector.load %arg4[%c0_21, %c0_22] : memref<32x2xf32, #tpu.memory_space<vmem>>, vector<32x2xf32>
    %34 = vector.broadcast %32 : vector<1x2xf32> to vector<32x2xf32>
    %35 = arith.mulf %33, %34 : vector<32x2xf32>
    %cst_23 = arith.constant dense<0.000000e+00> : vector<32xf32>
    %36 = vector.multi_reduction <add>, %35, %cst_23 [1] : vector<32x2xf32> to vector<32xf32>
    %37 = vector.shape_cast %36 : vector<32xf32> to vector<32x1xf32>
    %c0_24 = arith.constant 0 : index
    %c0_25 = arith.constant 0 : index
    %38 = vector.load %arg5[%c0_24, %c0_25] : memref<32x1xf32, #tpu.memory_space<vmem>>, vector<32x1xf32>
    %39 = arith.addf %37, %38 : vector<32x1xf32>
    %40 = arith.addf %23, %39 : vector<32x1xf32>
    %41 = arith.negf %40 : vector<32x1xf32>
    %42 = math.exp %41 : vector<32x1xf32>
    %cst_26 = arith.constant 1.000000e+00 : f32
    %43 = vector.broadcast %cst_26 : f32 to vector<32x1xf32>
    %44 = arith.addf %43, %42 : vector<32x1xf32>
    %45 = arith.divf %43, %44 : vector<32x1xf32>
    %46 = vector.broadcast %45 : vector<32x1xf32> to vector<32x256xf32>
    %47 = arith.mulf %1, %46 : vector<32x256xf32>
    %c0_27 = arith.constant 0 : index
    %c0_28 = arith.constant 0 : index
    %c0_29 = arith.constant 0 : index
    %48 = vector.load %arg6[%c0_27, %c0_28, %c0_29] : memref<1x32x256xf32, #tpu.memory_space<vmem>>, vector<1x32x256xf32>
    %49 = vector.shape_cast %48 : vector<1x32x256xf32> to vector<32x256xf32>
    %50 = vector.shape_cast %47 : vector<32x256xf32> to vector<1x32x256xf32>
    tpu.vector_store %arg6[%c0_27, %c0_28, %c0_29], %50 {strides = array<i32>} : memref<1x32x256xf32, #tpu.memory_space<vmem>>, vector<1x32x256xf32>,
    return
  }
  func.func @transform_0(%arg0: i32) -> (i32, i32, i32) {
    %c0_i32 = arith.constant 0 : i32
    %c0_i32_0 = arith.constant 0 : i32
    %c0_i32_1 = arith.constant 0 : i32
    return %arg0, %c0_i32, %c0_i32_0 : i32, i32, i32
  }
  func.func @transform_1(%arg0: i32) -> (i32, i32) {
    %c0_i32 = arith.constant 0 : i32
    %c0_i32_0 = arith.constant 0 : i32
    %c0_i32_1 = arith.constant 0 : i32
    return %c0_i32, %c0_i32_0 : i32, i32
  }
  func.func @transform_2(%arg0: i32) -> (i32, i32) {
    %c0_i32 = arith.constant 0 : i32
    %c0_i32_0 = arith.constant 0 : i32
    %c0_i32_1 = arith.constant 0 : i32
    return %c0_i32, %c0_i32_0 : i32, i32
  }
  func.func @transform_3(%arg0: i32) -> (i32, i32) {
    %c0_i32 = arith.constant 0 : i32
    %c0_i32_0 = arith.constant 0 : i32
    %c0_i32_1 = arith.constant 0 : i32
    return %c0_i32, %c0_i32_0 : i32, i32
  }
  func.func @transform_4(%arg0: i32) -> (i32, i32) {
    %c0_i32 = arith.constant 0 : i32
    %c0_i32_0 = arith.constant 0 : i32
    %c0_i32_1 = arith.constant 0 : i32
    return %c0_i32, %c0_i32_0 : i32, i32
  }
  func.func @transform_5(%arg0: i32) -> (i32, i32, i32) {
    %c0_i32 = arith.constant 0 : i32
    %c0_i32_0 = arith.constant 0 : i32
    %c0_i32_1 = arith.constant 0 : i32
    return %arg0, %c0_i32, %c0_i32_0 : i32, i32, i32
  }
}

</mosaic_0001>

<llo_original>
// kernel: tpu_custom_call.1
$region0: #{tpu_custom_call.1}
  #allocation0 [shape = 'u32[]', space=smem, size = 0x4, offset = 0x4, fixed_abs, tag = 'smem constant byte address 0x4 - core index']
  #allocation1 [shape = 'u32[144,128]{1,0:T(1,128)}', space=vmem, size = 0x12000, scoped, tag = 'internal scratch']
  %s0 = inlined_call_operand.hbm [shape: f32[2,32,256], index: 0, kind: input, shape index: {}]
  %s1 = inlined_call_operand.vmem [shape: f32[32,2], index: 1, kind: input, shape index: {}]
  %s2 = inlined_call_operand.vmem [shape: f32[1,2], index: 2, kind: input, shape index: {}]
  %s3 = inlined_call_operand.vmem [shape: f32[32,2], index: 3, kind: input, shape index: {}]
  %s4 = inlined_call_operand.vmem [shape: f32[32,1], index: 4, kind: input, shape index: {}]
  %s5 = inlined_call_operand.hbm [shape: f32[2,32,256], index: 5, kind: output, shape index: {}]
  %s6 = sld [smem:[#allocation0]]
  $region57: #{tpu_custom_call.1} parent=0
    _
  %s8 = ssub.s32 1, %s6
  %s9 = scalar_select 0, %s8, %s6
  $region1: #{tpu_custom_call.1} parent=0
    #allocation2 [shape = 'u8[65536]{0}', space=vmem, size = 0x10000, scoped, tag = 'input window, operand 0']
    #allocation3 [shape = 's32[2]{0}', space=sflag, size = 0x8, scoped, tag = 'scoped memory for tpu_custom_call.1']
    #allocation4 [shape = 's32[2]{0}', space=sflag, size = 0x8, scoped, tag = 'scoped memory for tpu_custom_call.1']
    #allocation5 [shape = 'u8[65536]{0}', space=vmem, size = 0x10000, scoped, tag = 'output window, operand 0']
    %10 = vsyncpa [#allocation3], 0
    %s11 = scalar_lea.sflag [#allocation3], 1
    %12 = vsyncpa %s11, 0
    %13 = vsyncpa [#allocation4], 0
    %s14 = scalar_lea.sflag [#allocation4], 1
    %15 = vsyncpa %s14, 0
    loop: start=0, step=1, limit=4
    $region2: #{tpu_custom_call.1} parent=1 // loop_pre_header
      _
    $region3: #{tpu_custom_call.1} parent=1 // loop_header
      %s17 = sphi 0, %s21
      %p18 = scmp.ge.s32.totalorder %s17, 4
      %s27 = sphi 0, %s29
      %s30 = sphi 0, %s27
      %s31 = sphi 0, %s30
      %s47 = sphi 0, %s31
      %s51 = sphi 0, %s51
      %s53 = sphi 0, %s51
      %s54 = sphi 0, %s53
      %s68 = sphi 0, %s54
      %s72 = sphi 0, %s72
      %s74 = sphi 0, %s72
      %s75 = sphi 0, %s74
      %s89 = sphi 0, %s75
      %s93 = sphi 0, %s93
      %s95 = sphi 0, %s93
      %s96 = sphi 0, %s95
      %s110 = sphi 0, %s96
      %s114 = sphi 0, %s114
      %s116 = sphi 0, %s114
      %s117 = sphi 0, %s116
      %s131 = sphi 0, %s117
      %s137 = sphi 0, %s139
      %s140 = sphi 0, %s137
      %s141 = sphi 0, %s140
      %s157 = sphi 0, %s141
    $region4: #{tpu_custom_call.1} parent=1 // loop_header_branch
      %20 = sbr.rel (%p18) target = $region8
    $region5: #{tpu_custom_call.1} parent=1 // loop_body
      %s22 = ssub.s32 %s17, 1
      %s23 = ssub.s32 %s17, 2
      %s24 = sadd.s32 %s17, 1
      %s25 = ssub.s32 %s17, %s24
      %p26 = scmp.eq.s32.totalorder %s25, 0
      %s28 = sadd.s32 %s27, 1
      %s29 = scalar_select %p26, %s27, %s28
      %p32 = pneg %p26
      %p33 = scmp.eq.s32.totalorder %s17, 1
      %p34 = por %p32, %p33
      %p35 = scmp.ne.s32.totalorder %s27, %s30
      %p36 = scmp.eq.s32.totalorder %s17, 0
      %p37 = por %p35, %p36
      %p38 = scmp.ne.s32.totalorder %s27, %s30
      %p39 = scmp.eq.s32.totalorder %s22, 1
      %p40 = por %p38, %p39
      %p41 = scmp.ne.s32.totalorder %s30, %s31
      %p42 = scmp.eq.s32.totalorder %s22, 0
      %p43 = por %p41, %p42
      %p44 = scmp.ne.s32.totalorder %s30, %s31
      %p45 = scmp.eq.s32.totalorder %s23, 1
      %p46 = por %p44, %p45
      %p48 = scmp.ne.s32.totalorder %s31, %s47
      %p49 = scmp.eq.s32.totalorder %s23, 0
      %p50 = por %p48, %p49
      %s52 = sadd.s32 %s51, 1
      %p55 = scmp.eq.s32.totalorder %s17, 1
      %p56 = scmp.ne.s32.totalorder %s51, %s53
      %p57 = scmp.eq.s32.totalorder %s17, 0
      %p58 = por %p56, %p57
      %p59 = scmp.ne.s32.totalorder %s51, %s53
      %p60 = scmp.eq.s32.totalorder %s22, 1
      %p61 = por %p59, %p60
      %p62 = scmp.ne.s32.totalorder %s53, %s54
      %p63 = scmp.eq.s32.totalorder %s22, 0
      %p64 = por %p62, %p63
      %p65 = scmp.ne.s32.totalorder %s53, %s54
      %p66 = scmp.eq.s32.totalorder %s23, 1
      %p67 = por %p65, %p66
      %p69 = scmp.ne.s32.totalorder %s54, %s68
      %p70 = scmp.eq.s32.totalorder %s23, 0
      %p71 = por %p69, %p70
      %s73 = sadd.s32 %s72, 1
      %p76 = scmp.eq.s32.totalorder %s17, 1
      %p77 = scmp.ne.s32.totalorder %s72, %s74
      %p78 = scmp.eq.s32.totalorder %s17, 0
      %p79 = por %p77, %p78
      %p80 = scmp.ne.s32.totalorder %s72, %s74
      %p81 = scmp.eq.s32.totalorder %s22, 1
      %p82 = por %p80, %p81
      %p83 = scmp.ne.s32.totalorder %s74, %s75
      %p84 = scmp.eq.s32.totalorder %s22, 0
      %p85 = por %p83, %p84
      %p86 = scmp.ne.s32.totalorder %s74, %s75
      %p87 = scmp.eq.s32.totalorder %s23, 1
      %p88 = por %p86, %p87
      %p90 = scmp.ne.s32.totalorder %s75, %s89
      %p91 = scmp.eq.s32.totalorder %s23, 0
      %p92 = por %p90, %p91
      %s94 = sadd.s32 %s93, 1
      %p97 = scmp.eq.s32.totalorder %s17, 1
      %p98 = scmp.ne.s32.totalorder %s93, %s95
      %p99 = scmp.eq.s32.totalorder %s17, 0
      %p100 = por %p98, %p99
      %p101 = scmp.ne.s32.totalorder %s93, %s95
      %p102 = scmp.eq.s32.totalorder %s22, 1
      %p103 = por %p101, %p102
      %p104 = scmp.ne.s32.totalorder %s95, %s96
      %p105 = scmp.eq.s32.totalorder %s22, 0
      %p106 = por %p104, %p105
      %p107 = scmp.ne.s32.totalorder %s95, %s96
      %p108 = scmp.eq.s32.totalorder %s23, 1
      %p109 = por %p107, %p108
      %p111 = scmp.ne.s32.totalorder %s96, %s110
      %p112 = scmp.eq.s32.totalorder %s23, 0
      %p113 = por %p111, %p112
      %s115 = sadd.s32 %s114, 1
      %p118 = scmp.eq.s32.totalorder %s17, 1
      %p119 = scmp.ne.s32.totalorder %s114, %s116
      %p120 = scmp.eq.s32.totalorder %s17, 0
      %p121 = por %p119, %p120
      %p122 = scmp.ne.s32.totalorder %s114, %s116
      %p123 = scmp.eq.s32.totalorder %s22, 1
      %p124 = por %p122, %p123
      %p125 = scmp.ne.s32.totalorder %s116, %s117
      %p126 = scmp.eq.s32.totalorder %s22, 0
      %p127 = por %p125, %p126
      %p128 = scmp.ne.s32.totalorder %s116, %s117
      %p129 = scmp.eq.s32.totalorder %s23, 1
      %p130 = por %p128, %p129
      %p132 = scmp.ne.s32.totalorder %s117, %s131
      %p133 = scmp.eq.s32.totalorder %s23, 0
      %p134 = por %p132, %p133
      %s135 = ssub.s32 %s17, %s24
      %p136 = scmp.eq.s32.totalorder %s135, 0
      %s138 = sadd.s32 %s137, 1
      %s139 = scalar_select %p136, %s137, %s138
      %p142 = pneg %p136
      %p143 = scmp.eq.s32.totalorder %s17, 1
      %p144 = por %p142, %p143
      %p145 = scmp.ne.s32.totalorder %s137, %s140
      %p146 = scmp.eq.s32.totalorder %s17, 0
      %p147 = por %p145, %p146
      %p148 = scmp.ne.s32.totalorder %s137, %s140
      %p149 = scmp.eq.s32.totalorder %s22, 1
      %p150 = por %p148, %p149
      %p151 = scmp.ne.s32.totalorder %s140, %s141
      %p152 = scmp.eq.s32.totalorder %s22, 0
      %p153 = por %p151, %p152
      %p154 = scmp.ne.s32.totalorder %s140, %s141
      %p155 = scmp.eq.s32.totalorder %s23, 1
      %p156 = por %p154, %p155
      %p158 = scmp.ne.s32.totalorder %s141, %s157
      %p159 = scmp.eq.s32.totalorder %s23, 0
      %p160 = por %p158, %p159
      %p161 = scmp.le.s32.totalorder 1, %s17
      %p162 = scmp.lt.s32.totalorder %s17, 3
      %p163 = pnand %p161, %p162
      %p164 = pneg %p163
      // Predicated region
      $region9: #{tpu_custom_call.1} parent=5 // pred_check
        _
      $region10: #{tpu_custom_call.1} parent=5 // pred_check_branch
        %166 = sbr.rel (%p163) target = $region12
      $region11: #{tpu_custom_call.1} parent=5 // pred_region
        %s167 = ssub.s32 %s17, 1
        // Predicated region
        $region13: #{tpu_custom_call.1} parent=11 // pred_check
          %p168 = pneg %p64
        $region14: #{tpu_custom_call.1} parent=11 // pred_check_branch
          %170 = sbr.rel (%p168) target = $region16
        $region15: #{tpu_custom_call.1} parent=11 // pred_region
          _
        $region16: #{tpu_custom_call.1} parent=11 // pred_fallthru
          _
        // Predicated region
        $region17: #{tpu_custom_call.1} parent=11 // pred_check
          %p171 = pneg %p85
        $region18: #{tpu_custom_call.1} parent=11 // pred_check_branch
          %173 = sbr.rel (%p171) target = $region20
        $region19: #{tpu_custom_call.1} parent=11 // pred_region
          _
        $region20: #{tpu_custom_call.1} parent=11 // pred_fallthru
          _
        // Predicated region
        $region21: #{tpu_custom_call.1} parent=11 // pred_check
          %p174 = pneg %p106
        $region22: #{tpu_custom_call.1} parent=11 // pred_check_branch
          %176 = sbr.rel (%p174) target = $region24
        $region23: #{tpu_custom_call.1} parent=11 // pred_region
          _
        $region24: #{tpu_custom_call.1} parent=11 // pred_fallthru
          _
        // Predicated region
        $region25: #{tpu_custom_call.1} parent=11 // pred_check
          %p177 = pneg %p127
        $region26: #{tpu_custom_call.1} parent=11 // pred_check_branch
          %179 = sbr.rel (%p177) target = $region28
        $region27: #{tpu_custom_call.1} parent=11 // pred_region
          _
        $region28: #{tpu_custom_call.1} parent=11 // pred_fallthru
          _
      $region12: #{tpu_custom_call.1} parent=5 // pred_fallthru
        _
      %p180 = scmp.lt.s32.totalorder %s17, 2
      // Predicated region
      $region29: #{tpu_custom_call.1} parent=5 // pred_check
        %p181 = pneg %p180
      $region30: #{tpu_custom_call.1} parent=5 // pred_check_branch
        %183 = sbr.rel (%p181) target = $region32
      $region31: #{tpu_custom_call.1} parent=5 // pred_region
        // Predicated region
        $region33: #{tpu_custom_call.1} parent=31 // pred_check
          %p184 = pneg %p37
        $region34: #{tpu_custom_call.1} parent=31 // pred_check_branch
          %186 = sbr.rel (%p184) target = $region36
        $region35: #{tpu_custom_call.1} parent=31 // pred_region
          %s187 = sand.u32 %s27, 1
          %s188 = scalar_lea.sflag [#allocation3], %s187
          %s189 = sand.u32 %s27, 1
          %s190 = smul.addr %s189, 64
          %s191 = scalar_lea.vmem [#allocation2], %s190
          %s193 = ssub.s32 1024, 1024
          %194 = vsyncadd %s188, %s193
          %s195 = smul.addr %s17, 8
          %s196 = smul.addr %s195, 128
          %s197 = scalar_lea.hbm %s0, %s196
          %s198 = sshll.u32 %s191, 4
          %s199 = int_to_ptr.vmem [resolvable:$true] %s198
          %204 = dma.hbm_to_vmem [thread:$0]  %s197, 1024, %s199, %s188, 256, 256, 16
        $region36: #{tpu_custom_call.1} parent=31 // pred_fallthru
          _
      $region32: #{tpu_custom_call.1} parent=5 // pred_fallthru
        _
      %p205 = scmp.le.s32.totalorder 1, %s17
      %p206 = scmp.lt.s32.totalorder %s17, 3
      %p207 = pnand %p205, %p206
      %p208 = pneg %p207
      // Predicated region
      $region37: #{tpu_custom_call.1} parent=5 // pred_check
        _
      $region38: #{tpu_custom_call.1} parent=5 // pred_check_branch
        %210 = sbr.rel (%p207) target = $region40
      $region39: #{tpu_custom_call.1} parent=5 // pred_region
        %s211 = ssub.s32 %s17, 1
        %s212 = sand.u32 %s30, 1
        %s213 = scalar_lea.sflag [#allocation3], %s212
        %s214 = sand.u32 %s30, 1
        %s215 = smul.addr %s214, 64
        %s216 = scalar_lea.vmem [#allocation2], %s215
        // Predicated region
        $region41: #{tpu_custom_call.1} parent=39 // pred_check
          %p217 = pneg %p43
        $region42: #{tpu_custom_call.1} parent=39 // pred_check_branch
          %219 = sbr.rel (%p217) target = $region44
        $region43: #{tpu_custom_call.1} parent=39 // pred_region
          %220 = dma.done %s213, 1024
        $region44: #{tpu_custom_call.1} parent=39 // pred_fallthru
          _
        %s221 = sand.u32 %s30, 1
        %s222 = scalar_lea.sflag [#allocation3], %s221
        %s223 = sand.u32 %s30, 1
        %s224 = smul.addr %s223, 64
        %s225 = scalar_lea.vmem [#allocation2], %s224
        %p226 = pneg %p43
        %p227 = pneg %p40
        %p228 = pneg %p64
        %p229 = pneg %p61
        %p230 = pneg %p85
        %p231 = pneg %p82
        %p232 = pneg %p106
        %p233 = pneg %p103
        %p234 = pneg %p127
        %p235 = pneg %p124
        %p236 = pneg %p153
        %p237 = pneg %p150
        %s238 = sand.u32 %s140, 1
        %s239 = scalar_lea.sflag [#allocation4], %s238
        %s240 = sand.u32 %s140, 1
        %s241 = smul.addr %s240, 64
        %s242 = scalar_lea.vmem [#allocation5], %s241
        %v243 = vld [vmem:[%s216] sm:$0xff]
        %v244 = vld [vmem:[%s216 + $0x8] sm:$0xff]
        %v245 = vld [vmem:[%s216 + $0x10] sm:$0xff]
        %v246 = vld [vmem:[%s216 + $0x18] sm:$0xff]
        %v247 = vld [vmem:[%s216 + $0x20] sm:$0xff]
        %v248 = vld [vmem:[%s216 + $0x28] sm:$0xff]
        %v249 = vld [vmem:[%s216 + $0x30] sm:$0xff]
        %v250 = vld [vmem:[%s216 + $0x38] sm:$0xff]
        %v251 = vadd.f32 %v243, %v244
        %252 = vadd.xlane.f32.xlu0 %v251
        %v253 = vpop.xlane.xlu0 %252
        %v254 = vadd.f32 %v245, %v246
        %255 = vadd.xlane.f32.xlu0 %v254
        %v256 = vpop.xlane.xlu0 %255
        %v257 = vadd.f32 %v247, %v248
        %258 = vadd.xlane.f32.xlu0 %v257
        %v259 = vpop.xlane.xlu0 %258
        %v260 = vadd.f32 %v249, %v250
        %261 = vadd.xlane.f32.xlu0 %v260
        %v262 = vpop.xlane.xlu0 %261
        %v263 = vmul.f32 %v253, 0.00390625
        %v264 = vmul.f32 %v256, 0.00390625
        %v265 = vmul.f32 %v259, 0.00390625
        %v266 = vmul.f32 %v262, 0.00390625
        %v267 = vmax.f32 %v243, %v244
        %268 = vmax.xlane.f32.xlu0 %v267
        %v269 = vpop.xlane.xlu0 %268
        %v270 = vmax.f32 %v245, %v246
        %271 = vmax.xlane.f32.xlu0 %v270
        %v272 = vpop.xlane.xlu0 %271
        %v273 = vmax.f32 %v247, %v248
        %274 = vmax.xlane.f32.xlu0 %v273
        %v275 = vpop.xlane.xlu0 %274
        %v276 = vmax.f32 %v249, %v250
        %277 = vmax.xlane.f32.xlu0 %v276
        %v278 = vpop.xlane.xlu0 %277
        %v279 = vld [vmem:[%s1] sm:$0xff]
        %v280 = vld [vmem:[%s1 + $0x8] sm:$0xff]
        %v281 = vld [vmem:[%s1 + $0x10] sm:$0xff]
        %v282 = vld [vmem:[%s1 + $0x18] sm:$0xff]
        %v283 = vmul.f32 %v279, %v263
        %v284 = vmul.f32 %v280, %v264
        %v285 = vmul.f32 %v281, %v265
        %v286 = vmul.f32 %v282, %v266
        %vm287 = vcmask 15360
        %v288 = vsel %vm287, %v283, 0.0
        %v289 = vsel %vm287, %v284, 0.0
        %v290 = vadd.f32 %v288, %v289
        %v291 = vsel %vm287, %v285, 0.0
        %v292 = vadd.f32 %v290, %v291
        %v293 = vsel %vm287, %v286, 0.0
        %v294 = vadd.f32 %v292, %v293
        %v295 = vrot.slane %v294, 4
        %v296 = vadd.f32 %v294, %v295
        %v297 = vrot.slane %v296, 2
        %v298 = vadd.f32 %v296, %v297
        %v299 = vrot.slane %v298, 1
        %v300 = vadd.f32 %v298, %v299
        %v301 = vld [vmem:[%s2] sm:$0x1]
        %v302 = vadd.f32 %v300, %v301
        %v303 = vmax.f32 %v302, 0.0
        %v304 = vld [vmem:[%s3] sm:$0xff]
        %v305 = vld [vmem:[%s3 + $0x8] sm:$0xff]
        %v306 = vld [vmem:[%s3 + $0x10] sm:$0xff]
        %v307 = vld [vmem:[%s3 + $0x18] sm:$0xff]
        %v308 = vlaneseq
        %v309 = vshrl.u32 %v308, 7
        %v310 = vsub.s32 0, %v309
        %v311 = vrot.slane %v303, %v310
        %v312 = vmul.f32 %v304, %v311
        %v313 = vmul.f32 %v305, %v311
        %v314 = vmul.f32 %v306, %v311
        %v315 = vmul.f32 %v307, %v311
        %v316 = vsel %vm287, %v312, 0.0
        %317 = vadd.xlane.f32.xlu0 %v316
        %v318 = vpop.xlane.xlu0 %317
        %v319 = vsel %vm287, %v313, 0.0
        %320 = vadd.xlane.f32.xlu0 %v319
        %v321 = vpop.xlane.xlu0 %320
        %v322 = vsel %vm287, %v314, 0.0
        %323 = vadd.xlane.f32.xlu0 %v322
        %v324 = vpop.xlane.xlu0 %323
        %v325 = vsel %vm287, %v315, 0.0
        %326 = vadd.xlane.f32.xlu0 %v325
        %v327 = vpop.xlane.xlu0 %326
        %v328 = vld [vmem:[%s4] sm:$0xff]
        %v329 = vld [vmem:[%s4 + $0x8] sm:$0xff]
        %v330 = vld [vmem:[%s4 + $0x10] sm:$0xff]
        %v331 = vld [vmem:[%s4 + $0x18] sm:$0xff]
        %v332 = vadd.f32 %v318, %v328
        %v333 = vadd.f32 %v321, %v329
        %v334 = vadd.f32 %v324, %v330
        %v335 = vadd.f32 %v327, %v331
        %v336 = vmul.f32 %v279, %v269
        %v337 = vmul.f32 %v280, %v272
        %v338 = vmul.f32 %v281, %v275
        %v339 = vmul.f32 %v282, %v278
        %v340 = vsel %vm287, %v336, 0.0
        %v341 = vsel %vm287, %v337, 0.0
        %v342 = vadd.f32 %v340, %v341
        %v343 = vsel %vm287, %v338, 0.0
        %v344 = vadd.f32 %v342, %v343
        %v345 = vsel %vm287, %v339, 0.0
        %v346 = vadd.f32 %v344, %v345
        %v347 = vrot.slane %v346, 4
        %v348 = vadd.f32 %v346, %v347
        %v349 = vrot.slane %v348, 2
        %v350 = vadd.f32 %v348, %v349
        %v351 = vrot.slane %v350, 1
        %v352 = vadd.f32 %v350, %v351
        %v353 = vadd.f32 %v352, %v301
        %v354 = vmax.f32 %v353, 0.0
        %v355 = vlaneseq
        %v356 = vshrl.u32 %v355, 7
        %v357 = vsub.s32 0, %v356
        %v358 = vrot.slane %v354, %v357
        %v359 = vmul.f32 %v304, %v358
        %v360 = vmul.f32 %v305, %v358
        %v361 = vmul.f32 %v306, %v358
        %v362 = vmul.f32 %v307, %v358
        %v363 = vsel %vm287, %v359, 0.0
        %364 = vadd.xlane.f32.xlu0 %v363
        %v365 = vpop.xlane.xlu0 %364
        %v366 = vsel %vm287, %v360, 0.0
        %367 = vadd.xlane.f32.xlu0 %v366
        %v368 = vpop.xlane.xlu0 %367
        %v369 = vsel %vm287, %v361, 0.0
        %370 = vadd.xlane.f32.xlu0 %v369
        %v371 = vpop.xlane.xlu0 %370
        %v372 = vsel %vm287, %v362, 0.0
        %373 = vadd.xlane.f32.xlu0 %v372
        %v374 = vpop.xlane.xlu0 %373
        %v375 = vadd.f32 %v365, %v328
        %v376 = vadd.f32 %v368, %v329
        %v377 = vadd.f32 %v371, %v330
        %v378 = vadd.f32 %v374, %v331
        %v379 = vadd.f32 %v332, %v375
        %v380 = vadd.f32 %v333, %v376
        %v381 = vadd.f32 %v334, %v377
        %v382 = vadd.f32 %v335, %v378
        %v383 = vxor.u32 %v379, 2147483648
        %v384 = vxor.u32 %v380, 2147483648
        %v385 = vxor.u32 %v381, 2147483648
        %v386 = vxor.u32 %v382, 2147483648
        %v387 = vmul.f32 %v383, 1.442695
        %v388 = vpow.pop %v387
        %v389 = vmul.f32 %v384, 1.442695
        %v390 = vpow.pop %v389
        %v391 = vmul.f32 %v385, 1.442695
        %v392 = vpow.pop %v391
        %v393 = vmul.f32 %v386, 1.442695
        %v394 = vpow.pop %v393
        %v395 = vadd.f32 %v388, 1.0
        %v396 = vadd.f32 %v390, 1.0
        %v397 = vadd.f32 %v392, 1.0
        %v398 = vadd.f32 %v394, 1.0
        %v399 = vrcp.pop %v395
        %v400 = vmul.f32 1.0, %v399
        %v401 = vrcp.pop %v396
        %v402 = vmul.f32 1.0, %v401
        %v403 = vrcp.pop %v397
        %v404 = vmul.f32 1.0, %v403
        %v405 = vrcp.pop %v398
        %v406 = vmul.f32 1.0, %v405
        %408 = vset.pattern.permute.xlu0 0
        %409 = vperm.xlu0 %408, %v400
        %v410 = vpop.permute.xlu0 %409
        %413 = vset.pattern.permute.xlu0 0
        %414 = vperm.xlu0 %413, %v402
        %v415 = vpop.permute.xlu0 %414
        %418 = vset.pattern.permute.xlu0 0
        %419 = vperm.xlu0 %418, %v404
        %v420 = vpop.permute.xlu0 %419
        %423 = vset.pattern.permute.xlu0 0
        %424 = vperm.xlu0 %423, %v406
        %v425 = vpop.permute.xlu0 %424
        %v427 = vmul.f32 %v243, %v410
        %v428 = vmul.f32 %v244, %v410
        %v429 = vmul.f32 %v245, %v415
        %v430 = vmul.f32 %v246, %v415
        %v431 = vmul.f32 %v247, %v420
        %v432 = vmul.f32 %v248, %v420
        %v433 = vmul.f32 %v249, %v425
        %v434 = vmul.f32 %v250, %v425
        %435 = vst [vmem:[%s242] sm:$0xff] %v427
        %436 = vst [vmem:[%s242 + $0x8] sm:$0xff] %v428
        %437 = vst [vmem:[%s242 + $0x10] sm:$0xff] %v429
        %438 = vst [vmem:[%s242 + $0x18] sm:$0xff] %v430
        %439 = vst [vmem:[%s242 + $0x20] sm:$0xff] %v431
        %440 = vst [vmem:[%s242 + $0x28] sm:$0xff] %v432
        %441 = vst [vmem:[%s242 + $0x30] sm:$0xff] %v433
        %442 = vst [vmem:[%s242 + $0x38] sm:$0xff] %v434
        %s443 = sand.u32 %s140, 1
        %s444 = scalar_lea.sflag [#allocation4], %s443
        %s445 = sand.u32 %s140, 1
        %s446 = smul.addr %s445, 64
        %s447 = scalar_lea.vmem [#allocation5], %s446
        // Predicated region
        $region45: #{tpu_custom_call.1} parent=39 // pred_check
          %p448 = pneg %p150
        $region46: #{tpu_custom_call.1} parent=39 // pred_check_branch
          %450 = sbr.rel (%p448) target = $region48
        $region47: #{tpu_custom_call.1} parent=39 // pred_region
          %s452 = ssub.s32 1024, 1024
          %453 = vsyncadd %s444, %s452
          %s454 = smul.addr %s22, 8
          %s455 = smul.addr %s454, 128
          %s456 = scalar_lea.hbm %s5, %s455
          %s457 = sshll.u32 %s447, 4
          %s458 = int_to_ptr.vmem [resolvable:$true] %s457
          %463 = dma.vmem_to_hbm [thread:$0]  %s458, 1024, %s456, %s444, 256, 256, 16
        $region48: #{tpu_custom_call.1} parent=39 // pred_fallthru
          _
      $region40: #{tpu_custom_call.1} parent=5 // pred_fallthru
        _
      %p464 = scmp.le.s32.totalorder 2, %s17
      // Predicated region
      $region49: #{tpu_custom_call.1} parent=5 // pred_check
        %p465 = pneg %p464
      $region50: #{tpu_custom_call.1} parent=5 // pred_check_branch
        %467 = sbr.rel (%p465) target = $region52
      $region51: #{tpu_custom_call.1} parent=5 // pred_region
        %s468 = ssub.s32 %s17, 2
        // Predicated region
        $region53: #{tpu_custom_call.1} parent=51 // pred_check
          %p469 = pneg %p156
        $region54: #{tpu_custom_call.1} parent=51 // pred_check_branch
          %471 = sbr.rel (%p469) target = $region56
        $region55: #{tpu_custom_call.1} parent=51 // pred_region
          %s472 = sand.u32 %s141, 1
          %s473 = scalar_lea.sflag [#allocation4], %s472
          %s474 = sand.u32 %s141, 1
          %s475 = smul.addr %s474, 64
          %s476 = scalar_lea.vmem [#allocation5], %s475
          %477 = dma.done %s473, 1024
        $region56: #{tpu_custom_call.1} parent=51 // pred_fallthru
          _
      $region52: #{tpu_custom_call.1} parent=5 // pred_fallthru
        _
    $region6: #{tpu_custom_call.1} parent=1 // loop_footer
      %s21 = sadd.s32 1, %s17
    $region7: #{tpu_custom_call.1} parent=1 // loop_footer_branch
      %16 = sbr.rel target = $region3
    $region8: #{tpu_custom_call.1} parent=1 // loop_exit
      _
    %478 = vsyncpa [#allocation3], 1
    %s479 = scalar_lea.sflag [#allocation3], 1
    %480 = vsyncpa %s479, 1
    %481 = vsyncpa [#allocation4], 1
    %s482 = scalar_lea.sflag [#allocation4], 1
    %483 = vsyncpa %s482, 1

</llo_original>
